<compile_context>
chip_gen: v7x
topology: tpu7x:2x2x1
jax: 0.10.0
libtpu: 0.0.40
codegen_flags: <defaults>
</compile_context>

<pallas_src>
import functools
import math

import jax
import jax.numpy as jnp
import numpy as np
from jax.experimental import pallas as pl
from jax.experimental.pallas import tpu as pltpu


# ---------------------------------------------------------------------------
# Fused forward kernel.  grid = (num_batch_tiles,); everything (first_linear,
# layers[0], n_mlp resident stack layers, final_linear) runs in one grid step.
# ---------------------------------------------------------------------------
def _latent_disc_kernel(x_ref, fwb_ref, fbb_ref, w0_ref, b0_ref,
                        wk_ref, bk_ref, wf_ref, bf_ref, out_ref,
                        *, chn, hidden_chn, n_mlp, dim):
    xt = x_ref[...]                  # (b_tile, chn*dim) f32, lane-dense
    fwb = fwb_ref[...]               # (hidden_chn*chn, dim) f32, scales folded
    fbb = fbb_ref[...]               # (hidden_chn, dim)     f32, scales folded

    # ---- first_linear (VPU broadcast-MAC over chn) + layers[0] as K-split
    #      per-hidden-channel partial MXU dots (no h_flat concat) ----
    z0 = b0_ref[...]                 # (1, dim) f32 bias (lr_mul*sqrt2 folded)
    for j in range(hidden_chn):       # tiny static loops -> VPU MACs
        col = fbb[j:j + 1, :]
        for c in range(chn):
            r = j * chn + c
            col = col + xt[:, c * dim:(c + 1) * dim] * fwb[r:r + 1, :]
        col = jnp.maximum(col, 0.2 * col)                # fused leaky-relu
        z0 = z0 + jnp.dot(col.astype(jnp.bfloat16), w0_ref[j],
                          preferred_element_type=jnp.float32)
    h = jnp.maximum(z0, 0.2 * z0)                        # (b_tile, dim) f32

    # ---- n_mlp MLP-stack layers: weights fully VMEM-resident, unrolled ----
    def layer(k, h):
        z = jnp.dot(h.astype(jnp.bfloat16), wk_ref[k],
                    preferred_element_type=jnp.float32) + bk_ref[k]
        return jnp.maximum(z, 0.2 * z)

    h = jax.lax.fori_loop(0, n_mlp, layer, h, unroll=True)

    # ---- final_linear (dim -> 1) as a lane reduction, no activation ----
    s = jnp.sum(h * wf_ref[...], axis=-1, keepdims=True)  # (b_tile, 1)
    out_ref[...] = s + bf_ref[...]


def _pick_batch_tile(b):
    # Expose >= 2 batch tiles once B >= 256 so the "parallel" axis feeds both
    # TensorCores on v7x (stack weights are VMEM-resident, so smaller tiles do
    # NOT re-stream weights).  Small B -> single full-batch tile.
    for t in (256, 128):
        if b % t == 0 and b // t >= 2:
            return t
    for t in (512, 256, 128, 64, 32, 16, 8):
        if b % t == 0:
            return t
    return b


def _vmem_limit_bytes(b_tile, chn, hidden_chn, dim, n_mlp):
    f32, bf16, lane = 4, 2, 128
    x_tile = b_tile * chn * dim * f32                      # lane-dense 2-D block
    out_tile = b_tile * lane * f32                         # (b_tile,1) lane-padded
    consts = ((hidden_chn * chn + hidden_chn + 2) * dim * f32   # fwb, fbb, b0, final_w
              + n_mlp * dim * f32 + lane * f32)                 # stack_b, final_b
    weights = (hidden_chn + n_mlp) * dim * dim * bf16      # w0_t + resident stack
    hidden = b_tile * dim * f32                            # live hidden state
    need = 2 * (x_tile + out_tile) + 2 * (consts + weights) + 2 * hidden
    need = int(need * 1.5)                                 # single slack factor
    # keep the request well under v7x's 64 MiB physical VMEM
    return int(min(max(need, 16 * 2 ** 20), 48 * 2 ** 20))


# ---------------------------------------------------------------------------
# Forward: single pallas_call; x reshaped once to a lane-dense 2-D view.
# ---------------------------------------------------------------------------
def latent_discriminator_forward(x, prep):
    b, chn, n = x.shape
    hidden_chn, dim, _ = prep["w0_t"].shape
    n_mlp = prep["stack_w_t"].shape[0]
    assert n == dim, "LatentDiscrinimator requires x.shape[-1] == dim (n == dim)"
    assert n_mlp >= 1
    b_tile = _pick_batch_tile(b)
    x2 = x.reshape(b, chn * dim)     # free view (contiguous), lane-dense

    kernel = functools.partial(_latent_disc_kernel, chn=chn,
                               hidden_chn=hidden_chn, n_mlp=n_mlp, dim=dim)
    grid = (b // b_tile,)
    out = pl.pallas_call(
        kernel,
        out_shape=jax.ShapeDtypeStruct((b, 1), jnp.float32),
        grid_spec=pltpu.PrefetchScalarGridSpec(
            num_scalar_prefetch=0,
            grid=grid,
            in_specs=[
                pl.BlockSpec((b_tile, chn * dim), lambda i: (i, 0)),          # x
                pl.BlockSpec((hidden_chn * chn, dim), lambda i: (0, 0)),      # fw_b
                pl.BlockSpec((hidden_chn, dim), lambda i: (0, 0)),            # fb_b
                pl.BlockSpec((hidden_chn, dim, dim), lambda i: (0, 0, 0)),    # w0_t (bf16)
                pl.BlockSpec((1, dim), lambda i: (0, 0)),                     # b0
                pl.BlockSpec((n_mlp, dim, dim), lambda i: (0, 0, 0)),         # stack_w_t (bf16, resident)
                pl.BlockSpec((n_mlp, 1, dim), lambda i: (0, 0, 0)),           # stack_b
                pl.BlockSpec((1, dim), lambda i: (0, 0)),                     # final_w
                pl.BlockSpec((1, 1), lambda i: (0, 0)),                       # final_b
            ],
            out_specs=pl.BlockSpec((b_tile, 1), lambda i: (i, 0)),
        ),
        compiler_params=pltpu.CompilerParams(
            dimension_semantics=("parallel",),
            vmem_limit_bytes=_vmem_limit_bytes(b_tile, chn, hidden_chn, dim, n_mlp),
        ),
    )(x2, prep["fw_b"], prep["fb_b"], prep["w0_t"], prep["b0"],
      prep["stack_w_t"], prep["stack_b"], prep["final_w"], prep["final_b"])
    return out, None


# ---------------------------------------------------------------------------
# One-time parameter repack (init-time, NOT per forward):
#   - matmul weights transposed to (in, out), EqualLinear scale*lr_mul*sqrt2
#     folded in, cast to bf16
#   - biases pre-scaled by lr_mul*sqrt2 (lr_mul only for the final layer), f32
#   - first-layer per-channel scalars pre-broadcast along the lane (dim) axis
# ---------------------------------------------------------------------------
def prepare_params(params, *, lr_mul=1.0):
    sqrt2 = math.sqrt(2.0)
    fw = params["first_w"].astype(jnp.float32)             # (hidden_chn, chn)
    hidden_chn, chn = fw.shape
    n_mlp, dim, _ = params["stack_w"].shape

    scale1 = (1.0 / math.sqrt(chn)) * lr_mul
    c0 = (1.0 / math.sqrt(hidden_chn * dim)) * lr_mul * sqrt2
    c_stack = (1.0 / math.sqrt(dim)) * lr_mul * sqrt2
    c_final = (1.0 / math.sqrt(dim)) * lr_mul

    fw_b = jnp.broadcast_to(
        (fw * (scale1 * sqrt2)).reshape(hidden_chn * chn, 1),
        (hidden_chn * chn, dim)).astype(jnp.float32)
    fb_b = jnp.broadcast_to(
        (params["first_b"].astype(jnp.float32) * (lr_mul * sqrt2)).reshape(hidden_chn, 1),
        (hidden_chn, dim)).astype(jnp.float32)

    w0_t = (jnp.transpose(params["l0_w"]).astype(jnp.float32) * c0)     # (hid*dim, dim)
    w0_t = w0_t.reshape(hidden_chn, dim, dim).astype(jnp.bfloat16)
    stack_w_t = (jnp.transpose(params["stack_w"], (0, 2, 1)).astype(jnp.float32)
                 * c_stack).astype(jnp.bfloat16)

    return {
        "fw_b": fw_b,                                                    # (hid*chn, dim) f32
        "fb_b": fb_b,                                                    # (hid, dim)     f32
        "w0_t": w0_t,                                                    # (hid, dim, dim) bf16
        "b0": (params["l0_b"].astype(jnp.float32) * (lr_mul * sqrt2)).reshape(1, dim),
        "stack_w_t": stack_w_t,                                          # (n_mlp, dim, dim) bf16
        "stack_b": (params["stack_b"].astype(jnp.float32) * (lr_mul * sqrt2)
                    ).reshape(n_mlp, 1, dim),
        "final_w": (params["final_w"].astype(jnp.float32) * c_final).reshape(1, dim),
        "final_b": (params["final_b"].astype(jnp.float32) * lr_mul).reshape(1, 1),
    }


# ---------------------------------------------------------------------------
# Deterministic raw (PyTorch-layout) params: W ~ N(0,1)/lr_mul, b = 0
# ---------------------------------------------------------------------------
def init_params(key, chn, dim, n_mlp, hidden_chn):
    keys = jax.random.split(key, n_mlp + 3)
    p = {}
    p["first_w"] = jax.random.normal(keys[0], (hidden_chn, chn), jnp.float32)
    p["first_b"] = jnp.zeros((hidden_chn,), jnp.float32)
    p["l0_w"] = jax.random.normal(keys[1], (dim, hidden_chn * dim), jnp.float32)
    p["l0_b"] = jnp.zeros((dim,), jnp.float32)
    p["stack_w"] = jnp.stack(
        [jax.random.normal(keys[2 + i], (dim, dim), jnp.float32) for i in range(n_mlp)],
        axis=0)
    p["stack_b"] = jnp.zeros((n_mlp, dim), jnp.float32)
    p["final_w"] = jax.random.normal(keys[2 + n_mlp], (1, dim), jnp.float32)
    p["final_b"] = jnp.zeros((1,), jnp.float32)
    return p


# ---------------------------------------------------------------------------
# Pure-JAX f32 reference (mirrors the PyTorch EqualLinear / fused_leaky_relu)
# ---------------------------------------------------------------------------
def _ref_equal_linear(x, w, b, lr_mul=1.0, fused_lrelu=False):
    scale = (1.0 / math.sqrt(w.shape[1])) * lr_mul
    out = x @ (w * scale).T + b.reshape(1, -1) * lr_mul
    if fused_lrelu:
        out = jnp.where(out >= 0.0, out, 0.2 * out) * math.sqrt(2.0)
    return out


def reference_forward(x, params):
    b, c, n = x.shape
    h = _ref_equal_linear(
        jnp.transpose(x, (0, 2, 1)).reshape(-1, c),
        params["first_w"], params["first_b"], fused_lrelu=True)
    h = jnp.transpose(h.reshape(b, n, -1), (0, 2, 1)).reshape(b, -1)
    h = _ref_equal_linear(h, params["l0_w"], params["l0_b"], fused_lrelu=True)
    for i in range(params["stack_w"].shape[0]):
        h = _ref_equal_linear(h, params["stack_w"][i], params["stack_b"][i],
                              fused_lrelu=True)
    out = _ref_equal_linear(h, params["final_w"], params["final_b"],
                            fused_lrelu=False)
    return out, None


if __name__ == "__main__":
    # Small shapes consistent with the module: x is (batch, chn, n) and the
    # forward implicitly requires n == dim.  dim=128 keeps the feature axis
    # lane-dense; hidden_chn=2 exercises the general first-layer path.
    B, CHN, DIM, N_MLP, HIDDEN_CHN = 2, 4, 128, 2, 2

    key = jax.random.PRNGKey(0)
    kx, kp = jax.random.split(key)
    x = jax.random.normal(kx, (B, CHN, DIM), jnp.float32)
    raw = init_params(kp, CHN, DIM, N_MLP, HIDDEN_CHN)
    prep = prepare_params(raw)          # one-time weight repack (not per forward)

    out, aux = latent_discriminator_forward(x, prep)
    out = jax.block_until_ready(out)

    ref, _ = reference_forward(x, raw)
    assert out.shape == (B, 1)
    assert aux is None
    # bf16 weights (f32 accumulation / activations): ~1e-2 level differences
    # vs the pure-f32 reference are expected.
    np.testing.assert_allclose(np.asarray(out), np.asarray(ref), rtol=5e-2, atol=5e-2)

    print("KERNEL_OK")
</pallas_src>

<mosaic_0001>
module attributes {stable_mosaic.version = 11 : i64} {
  func.func @_latent_disc_kernel(%arg0: i32, %arg1: memref<2x512xf32, #tpu.memory_space<vmem>>, %arg2: memref<8x128xf32, #tpu.memory_space<vmem>>, %arg3: memref<2x128xf32, #tpu.memory_space<vmem>>, %arg4: memref<2x128x128xbf16, #tpu.memory_space<vmem>>, %arg5: memref<1x128xf32, #tpu.memory_space<vmem>>, %arg6: memref<2x128x128xbf16, #tpu.memory_space<vmem>>, %arg7: memref<2x1x128xf32, #tpu.memory_space<vmem>>, %arg8: memref<1x128xf32, #tpu.memory_space<vmem>>, %arg9: memref<1x1xf32, #tpu.memory_space<vmem>>, %arg10: memref<2x1xf32, #tpu.memory_space<vmem>>) attributes {dimension_semantics = [#tpu.dimension_semantics<parallel>], iteration_bounds = array<i64: 1>, scalar_prefetch = 0 : i64, scratch_operands = 0 : i64, tpu.core_type = #tpu.core_type<tc>, window_params = [{transform_indices = @transform_0, window_bounds = array<i64: 2, 512>}, {pipeline_mode = #tpu.pipeline_mode<synchronous>, transform_indices = @transform_1, window_bounds = array<i64: 8, 128>}, {pipeline_mode = #tpu.pipeline_mode<synchronous>, transform_indices = @transform_2, window_bounds = array<i64: 2, 128>}, {pipeline_mode = #tpu.pipeline_mode<synchronous>, transform_indices = @transform_3, window_bounds = array<i64: 2, 128, 128>}, {pipeline_mode = #tpu.pipeline_mode<synchronous>, transform_indices = @transform_4, window_bounds = array<i64: 1, 128>}, {pipeline_mode = #tpu.pipeline_mode<synchronous>, transform_indices = @transform_5, window_bounds = array<i64: 2, 128, 128>}, {pipeline_mode = #tpu.pipeline_mode<synchronous>, transform_indices = @transform_6, window_bounds = array<i64: 2, 1, 128>}, {pipeline_mode = #tpu.pipeline_mode<synchronous>, transform_indices = @transform_7, window_bounds = array<i64: 1, 128>}, {pipeline_mode = #tpu.pipeline_mode<synchronous>, transform_indices = @transform_8, window_bounds = array<i64: 1, 1>}, {transform_indices = @transform_9, window_bounds = array<i64: 2, 1>}]} {
    %c0 = arith.constant 0 : index
    %c0_0 = arith.constant 0 : index
    %0 = vector.load %arg1[%c0, %c0_0] : memref<2x512xf32, #tpu.memory_space<vmem>>, vector<2x512xf32>
    %c0_1 = arith.constant 0 : index
    %c0_2 = arith.constant 0 : index
    %1 = vector.load %arg2[%c0_1, %c0_2] : memref<8x128xf32, #tpu.memory_space<vmem>>, vector<8x128xf32>
    %c0_3 = arith.constant 0 : index
    %c0_4 = arith.constant 0 : index
    %2 = vector.load %arg3[%c0_3, %c0_4] : memref<2x128xf32, #tpu.memory_space<vmem>>, vector<2x128xf32>
    %c0_5 = arith.constant 0 : index
    %c0_6 = arith.constant 0 : index
    %3 = vector.load %arg5[%c0_5, %c0_6] : memref<1x128xf32, #tpu.memory_space<vmem>>, vector<1x128xf32>
    %4 = vector.extract_strided_slice %2 {offsets = [0, 0], sizes = [1, 128], strides = [1, 1]} : vector<2x128xf32> to vector<1x128xf32>
    %5 = vector.extract_strided_slice %0 {offsets = [0, 0], sizes = [2, 128], strides = [1, 1]} : vector<2x512xf32> to vector<2x128xf32>
    %6 = vector.extract_strided_slice %1 {offsets = [0, 0], sizes = [1, 128], strides = [1, 1]} : vector<8x128xf32> to vector<1x128xf32>
    %7 = vector.broadcast %6 : vector<1x128xf32> to vector<2x128xf32>
    %8 = arith.mulf %5, %7 : vector<2x128xf32>
    %9 = vector.broadcast %4 : vector<1x128xf32> to vector<2x128xf32>
    %10 = arith.addf %9, %8 : vector<2x128xf32>
    %11 = vector.extract_strided_slice %0 {offsets = [0, 128], sizes = [2, 128], strides = [1, 1]} : vector<2x512xf32> to vector<2x128xf32>
    %12 = vector.extract_strided_slice %1 {offsets = [1, 0], sizes = [1, 128], strides = [1, 1]} : vector<8x128xf32> to vector<1x128xf32>
    %13 = vector.broadcast %12 : vector<1x128xf32> to vector<2x128xf32>
    %14 = arith.mulf %11, %13 : vector<2x128xf32>
    %15 = arith.addf %10, %14 : vector<2x128xf32>
    %16 = vector.extract_strided_slice %0 {offsets = [0, 256], sizes = [2, 128], strides = [1, 1]} : vector<2x512xf32> to vector<2x128xf32>
    %17 = vector.extract_strided_slice %1 {offsets = [2, 0], sizes = [1, 128], strides = [1, 1]} : vector<8x128xf32> to vector<1x128xf32>
    %18 = vector.broadcast %17 : vector<1x128xf32> to vector<2x128xf32>
    %19 = arith.mulf %16, %18 : vector<2x128xf32>
    %20 = arith.addf %15, %19 : vector<2x128xf32>
    %21 = vector.extract_strided_slice %0 {offsets = [0, 384], sizes = [2, 128], strides = [1, 1]} : vector<2x512xf32> to vector<2x128xf32>
    %22 = vector.extract_strided_slice %1 {offsets = [3, 0], sizes = [1, 128], strides = [1, 1]} : vector<8x128xf32> to vector<1x128xf32>
    %23 = vector.broadcast %22 : vector<1x128xf32> to vector<2x128xf32>
    %24 = arith.mulf %21, %23 : vector<2x128xf32>
    %25 = arith.addf %20, %24 : vector<2x128xf32>
    %cst = arith.constant 2.000000e-01 : f32
    %26 = vector.broadcast %cst : f32 to vector<2x128xf32>
    %27 = arith.mulf %26, %25 : vector<2x128xf32>
    %28 = arith.maximumf %25, %27 : vector<2x128xf32>
    %29 = arith.truncf %28 : vector<2x128xf32> to vector<2x128xbf16>
    %c0_7 = arith.constant 0 : index
    %c0_8 = arith.constant 0 : index
    %c0_9 = arith.constant 0 : index
    %30 = vector.load %arg4[%c0_7, %c0_8, %c0_9] : memref<2x128x128xbf16, #tpu.memory_space<vmem>>, vector<1x128x128xbf16>
    %31 = vector.shape_cast %30 : vector<1x128x128xbf16> to vector<128x128xbf16>
    %cst_10 = arith.constant dense<0.000000e+00> : vector<2x128xf32>
    %32 = tpu.matmul %29, %31, %cst_10 {dimension_numbers = #tpu.dot_dimension_numbers<[1], [0], [0], [1], [0, 0, 1, 1], [], []>} : vector<2x128xbf16>, vector<128x128xbf16>, vector<2x128xf32> -> vector<2x128xf32>
    %33 = vector.broadcast %3 : vector<1x128xf32> to vector<2x128xf32>
    %34 = arith.addf %33, %32 : vector<2x128xf32>
    %35 = vector.extract_strided_slice %2 {offsets = [1, 0], sizes = [1, 128], strides = [1, 1]} : vector<2x128xf32> to vector<1x128xf32>
    %36 = vector.extract_strided_slice %0 {offsets = [0, 0], sizes = [2, 128], strides = [1, 1]} : vector<2x512xf32> to vector<2x128xf32>
    %37 = vector.extract_strided_slice %1 {offsets = [4, 0], sizes = [1, 128], strides = [1, 1]} : vector<8x128xf32> to vector<1x128xf32>
    %38 = vector.broadcast %37 : vector<1x128xf32> to vector<2x128xf32>
    %39 = arith.mulf %36, %38 : vector<2x128xf32>
    %40 = vector.broadcast %35 : vector<1x128xf32> to vector<2x128xf32>
    %41 = arith.addf %40, %39 : vector<2x128xf32>
    %42 = vector.extract_strided_slice %0 {offsets = [0, 128], sizes = [2, 128], strides = [1, 1]} : vector<2x512xf32> to vector<2x128xf32>
    %43 = vector.extract_strided_slice %1 {offsets = [5, 0], sizes = [1, 128], strides = [1, 1]} : vector<8x128xf32> to vector<1x128xf32>
    %44 = vector.broadcast %43 : vector<1x128xf32> to vector<2x128xf32>
    %45 = arith.mulf %42, %44 : vector<2x128xf32>
    %46 = arith.addf %41, %45 : vector<2x128xf32>
    %47 = vector.extract_strided_slice %0 {offsets = [0, 256], sizes = [2, 128], strides = [1, 1]} : vector<2x512xf32> to vector<2x128xf32>
    %48 = vector.extract_strided_slice %1 {offsets = [6, 0], sizes = [1, 128], strides = [1, 1]} : vector<8x128xf32> to vector<1x128xf32>
    %49 = vector.broadcast %48 : vector<1x128xf32> to vector<2x128xf32>
    %50 = arith.mulf %47, %49 : vector<2x128xf32>
    %51 = arith.addf %46, %50 : vector<2x128xf32>
    %52 = vector.extract_strided_slice %0 {offsets = [0, 384], sizes = [2, 128], strides = [1, 1]} : vector<2x512xf32> to vector<2x128xf32>
    %53 = vector.extract_strided_slice %1 {offsets = [7, 0], sizes = [1, 128], strides = [1, 1]} : vector<8x128xf32> to vector<1x128xf32>
    %54 = vector.broadcast %53 : vector<1x128xf32> to vector<2x128xf32>
    %55 = arith.mulf %52, %54 : vector<2x128xf32>
    %56 = arith.addf %51, %55 : vector<2x128xf32>
    %cst_11 = arith.constant 2.000000e-01 : f32
    %57 = vector.broadcast %cst_11 : f32 to vector<2x128xf32>
    %58 = arith.mulf %57, %56 : vector<2x128xf32>
    %59 = arith.maximumf %56, %58 : vector<2x128xf32>
    %60 = arith.truncf %59 : vector<2x128xf32> to vector<2x128xbf16>
    %c1 = arith.constant 1 : index
    %c0_12 = arith.constant 0 : index
    %c0_13 = arith.constant 0 : index
    %61 = vector.load %arg4[%c1, %c0_12, %c0_13] : memref<2x128x128xbf16, #tpu.memory_space<vmem>>, vector<1x128x128xbf16>
    %62 = vector.shape_cast %61 : vector<1x128x128xbf16> to vector<128x128xbf16>
    %cst_14 = arith.constant dense<0.000000e+00> : vector<2x128xf32>
    %63 = tpu.matmul %60, %62, %cst_14 {dimension_numbers = #tpu.dot_dimension_numbers<[1], [0], [0], [1], [0, 0, 1, 1], [], []>} : vector<2x128xbf16>, vector<128x128xbf16>, vector<2x128xf32> -> vector<2x128xf32>
    %64 = arith.addf %34, %63 : vector<2x128xf32>
    %cst_15 = arith.constant 2.000000e-01 : f32
    %65 = vector.broadcast %cst_15 : f32 to vector<2x128xf32>
    %66 = arith.mulf %65, %64 : vector<2x128xf32>
    %67 = arith.maximumf %64, %66 : vector<2x128xf32>
    %c0_i32 = arith.constant 0 : i32
    %68 = arith.truncf %67 : vector<2x128xf32> to vector<2x128xbf16>
    %69 = arith.index_cast %c0_i32 : i32 to index
    %c0_16 = arith.constant 0 : index
    %c0_17 = arith.constant 0 : index
    %70 = vector.load %arg6[%69, %c0_16, %c0_17] : memref<2x128x128xbf16, #tpu.memory_space<vmem>>, vector<1x128x128xbf16>
    %71 = vector.shape_cast %70 : vector<1x128x128xbf16> to vector<128x128xbf16>
    %cst_18 = arith.constant dense<0.000000e+00> : vector<2x128xf32>
    %72 = tpu.matmul %68, %71, %cst_18 {dimension_numbers = #tpu.dot_dimension_numbers<[1], [0], [0], [1], [0, 0, 1, 1], [], []>} : vector<2x128xbf16>, vector<128x128xbf16>, vector<2x128xf32> -> vector<2x128xf32>
    %73 = arith.index_cast %c0_i32 : i32 to index
    %c0_19 = arith.constant 0 : index
    %c0_20 = arith.constant 0 : index
    %74 = vector.load %arg7[%73, %c0_19, %c0_20] : memref<2x1x128xf32, #tpu.memory_space<vmem>>, vector<1x1x128xf32>
    %75 = vector.shape_cast %74 : vector<1x1x128xf32> to vector<1x128xf32>
    %76 = vector.broadcast %75 : vector<1x128xf32> to vector<2x128xf32>
    %77 = arith.addf %72, %76 : vector<2x128xf32>
    %cst_21 = arith.constant 2.000000e-01 : f32
    %78 = vector.broadcast %cst_21 : f32 to vector<2x128xf32>
    %79 = arith.mulf %78, %77 : vector<2x128xf32>
    %80 = arith.maximumf %77, %79 : vector<2x128xf32>
    %c1_i32 = arith.constant 1 : i32
    %81 = arith.truncf %80 : vector<2x128xf32> to vector<2x128xbf16>
    %82 = arith.index_cast %c1_i32 : i32 to index
    %c0_22 = arith.constant 0 : index
    %c0_23 = arith.constant 0 : index
    %83 = vector.load %arg6[%82, %c0_22, %c0_23] : memref<2x128x128xbf16, #tpu.memory_space<vmem>>, vector<1x128x128xbf16>
    %84 = vector.shape_cast %83 : vector<1x128x128xbf16> to vector<128x128xbf16>
    %cst_24 = arith.constant dense<0.000000e+00> : vector<2x128xf32>
    %85 = tpu.matmul %81, %84, %cst_24 {dimension_numbers = #tpu.dot_dimension_numbers<[1], [0], [0], [1], [0, 0, 1, 1], [], []>} : vector<2x128xbf16>, vector<128x128xbf16>, vector<2x128xf32> -> vector<2x128xf32>
    %86 = arith.index_cast %c1_i32 : i32 to index
    %c0_25 = arith.constant 0 : index
    %c0_26 = arith.constant 0 : index
    %87 = vector.load %arg7[%86, %c0_25, %c0_26] : memref<2x1x128xf32, #tpu.memory_space<vmem>>, vector<1x1x128xf32>
    %88 = vector.shape_cast %87 : vector<1x1x128xf32> to vector<1x128xf32>
    %89 = vector.broadcast %88 : vector<1x128xf32> to vector<2x128xf32>
    %90 = arith.addf %85, %89 : vector<2x128xf32>
    %cst_27 = arith.constant 2.000000e-01 : f32
    %91 = vector.broadcast %cst_27 : f32 to vector<2x128xf32>
    %92 = arith.mulf %91, %90 : vector<2x128xf32>
    %93 = arith.maximumf %90, %92 : vector<2x128xf32>
    %c2_i32 = arith.constant 2 : i32
    %c0_28 = arith.constant 0 : index
    %c0_29 = arith.constant 0 : index
    %94 = vector.load %arg8[%c0_28, %c0_29] : memref<1x128xf32, #tpu.memory_space<vmem>>, vector<1x128xf32>
    %95 = vector.broadcast %94 : vector<1x128xf32> to vector<2x128xf32>
    %96 = arith.mulf %93, %95 : vector<2x128xf32>
    %cst_30 = arith.constant dense<0.000000e+00> : vector<2xf32>
    %97 = vector.multi_reduction <add>, %96, %cst_30 [1] : vector<2x128xf32> to vector<2xf32>
    %98 = vector.shape_cast %97 : vector<2xf32> to vector<2x1xf32>
    %c0_31 = arith.constant 0 : index
    %c0_32 = arith.constant 0 : index
    %99 = vector.load %arg9[%c0_31, %c0_32] : memref<1x1xf32, #tpu.memory_space<vmem>>, vector<1x1xf32>
    %100 = vector.broadcast %99 : vector<1x1xf32> to vector<2x1xf32>
    %101 = arith.addf %98, %100 : vector<2x1xf32>
    %c0_33 = arith.constant 0 : index
    %c0_34 = arith.constant 0 : index
    %102 = vector.load %arg10[%c0_33, %c0_34] : memref<2x1xf32, #tpu.memory_space<vmem>>, vector<2x1xf32>
    tpu.vector_store %arg10[%c0_33, %c0_34], %101 {strides = array<i32>} : memref<2x1xf32, #tpu.memory_space<vmem>>, vector<2x1xf32>,
    return
  }
  func.func @transform_0(%arg0: i32) -> (i32, i32) {
    %c0_i32 = arith.constant 0 : i32
    %c0_i32_0 = arith.constant 0 : i32
    return %arg0, %c0_i32 : i32, i32
  }
  func.func @transform_1(%arg0: i32) -> (i32, i32) {
    %c0_i32 = arith.constant 0 : i32
    %c0_i32_0 = arith.constant 0 : i32
    %c0_i32_1 = arith.constant 0 : i32
    return %c0_i32, %c0_i32_0 : i32, i32
  }
  func.func @transform_2(%arg0: i32) -> (i32, i32) {
    %c0_i32 = arith.constant 0 : i32
    %c0_i32_0 = arith.constant 0 : i32
    %c0_i32_1 = arith.constant 0 : i32
    return %c0_i32, %c0_i32_0 : i32, i32
  }
  func.func @transform_3(%arg0: i32) -> (i32, i32, i32) {
    %c0_i32 = arith.constant 0 : i32
    %c0_i32_0 = arith.constant 0 : i32
    %c0_i32_1 = arith.constant 0 : i32
    %c0_i32_2 = arith.constant 0 : i32
    return %c0_i32, %c0_i32_0, %c0_i32_1 : i32, i32, i32
  }
  func.func @transform_4(%arg0: i32) -> (i32, i32) {
    %c0_i32 = arith.constant 0 : i32
    %c0_i32_0 = arith.constant 0 : i32
    %c0_i32_1 = arith.constant 0 : i32
    return %c0_i32, %c0_i32_0 : i32, i32
  }
  func.func @transform_5(%arg0: i32) -> (i32, i32, i32) {
    %c0_i32 = arith.constant 0 : i32
    %c0_i32_0 = arith.constant 0 : i32
    %c0_i32_1 = arith.constant 0 : i32
    %c0_i32_2 = arith.constant 0 : i32
    return %c0_i32, %c0_i32_0, %c0_i32_1 : i32, i32, i32
  }
  func.func @transform_6(%arg0: i32) -> (i32, i32, i32) {
    %c0_i32 = arith.constant 0 : i32
    %c0_i32_0 = arith.constant 0 : i32
    %c0_i32_1 = arith.constant 0 : i32
    %c0_i32_2 = arith.constant 0 : i32
    return %c0_i32, %c0_i32_0, %c0_i32_1 : i32, i32, i32
  }
  func.func @transform_7(%arg0: i32) -> (i32, i32) {
    %c0_i32 = arith.constant 0 : i32
    %c0_i32_0 = arith.constant 0 : i32
    %c0_i32_1 = arith.constant 0 : i32
    return %c0_i32, %c0_i32_0 : i32, i32
  }
  func.func @transform_8(%arg0: i32) -> (i32, i32) {
    %c0_i32 = arith.constant 0 : i32
    %c0_i32_0 = arith.constant 0 : i32
    %c0_i32_1 = arith.constant 0 : i32
    return %c0_i32, %c0_i32_0 : i32, i32
  }
  func.func @transform_9(%arg0: i32) -> (i32, i32) {
    %c0_i32 = arith.constant 0 : i32
    %c0_i32_0 = arith.constant 0 : i32
    return %arg0, %c0_i32 : i32, i32
  }
}

</mosaic_0001>

<llo_original>
// kernel: tpu_custom_call.1
$region0: #{tpu_custom_call.1}
  #allocation0 [shape = 'u32[]', space=smem, size = 0x4, offset = 0x4, fixed_abs, tag = 'smem constant byte address 0x4 - core index']
  #allocation1 [shape = 'u32[144,128]{1,0:T(1,128)}', space=vmem, size = 0x12000, scoped, tag = 'internal scratch']
  #allocation2 [shape = 'f32[1,1]{1,0:T(1,128)S(1)}', space=vmem, size = 0x200, scoped, tag = 'scoped memory for tpu_custom_call.1']
  %s0 = inlined_call_operand.hbm [shape: f32[2,512], index: 0, kind: input, shape index: {}]
  %s1 = inlined_call_operand.hbm [shape: f32[8,128], index: 1, kind: input, shape index: {}]
  %s2 = inlined_call_operand.vmem [shape: f32[2,128], index: 2, kind: input, shape index: {}]
  %s3 = inlined_call_operand.hbm [shape: bf16[2,128,128], index: 3, kind: input, shape index: {}]
  %s4 = inlined_call_operand.vmem [shape: f32[1,128], index: 4, kind: input, shape index: {}]
  %s5 = inlined_call_operand.hbm [shape: bf16[2,128,128], index: 5, kind: input, shape index: {}]
  %s6 = inlined_call_operand.vmem [shape: f32[2,1,128], index: 6, kind: input, shape index: {}]
  %s7 = inlined_call_operand.vmem [shape: f32[1,128], index: 7, kind: input, shape index: {}]
  %s8 = inlined_call_operand.<no memory space> [shape: f32[1,1], index: 8, kind: input, shape index: {}]
  %s9 = inlined_call_operand.vmem [shape: f32[2,1], index: 9, kind: output, shape index: {}]
  %s10 = sld [smem:[#allocation0]]
  $region62: #{tpu_custom_call.1} parent=0
    _
  %s12 = ssub.s32 1, %s10
  %s13 = scalar_select 0, %s12, %s10
  %v14 = vstv %s8
  %15 = vst [vmem:[#allocation2] sm:$0x1] %v14
  $region1: #{tpu_custom_call.1} parent=0
    #allocation3 [shape = 'u8[4096]{0}', space=vmem, size = 0x1000, scoped, tag = 'input window, operand 0, single buffered']
    #allocation4 [shape = 's32[1]{0}', space=sflag, size = 0x4, scoped, tag = 'scoped memory for tpu_custom_call.1']
    #allocation5 [shape = 'u8[4096]{0}', space=vmem, size = 0x1000, scoped, tag = 'input window, operand 1, single buffered']
    #allocation6 [shape = 's32[1]{0}', space=sflag, size = 0x4, scoped, tag = 'scoped memory for tpu_custom_call.1']
    #allocation7 [shape = 'u8[65536]{0}', space=vmem, size = 0x10000, scoped, tag = 'input window, operand 3, single buffered']
    #allocation8 [shape = 'u8[65536]{0}', space=vmem, size = 0x10000, scoped, tag = 'input window, operand 5, single buffered']
    #allocation9 [shape = 's32[1]{0}', space=sflag, size = 0x4, scoped, tag = 'scoped memory for tpu_custom_call.1']
    %16 = vsyncpa [#allocation4], 0
    %17 = vsyncpa [#allocation6], 0
    %18 = vsyncpa [#allocation9], 0
    // Predicated region
    $region2: #{tpu_custom_call.1} parent=1 // pred_check
      _
    $region3: #{tpu_custom_call.1} parent=1 // pred_check_branch
      %20 = sbr.rel (0) target = $region5
    $region4: #{tpu_custom_call.1} parent=1 // pred_region
      %s22 = ssub.s32 128, 128
      %23 = vsyncadd [#allocation4], %s22
      %s25 = sshll.u32 [#allocation3], 4
      %s26 = int_to_ptr.vmem [resolvable:$true] %s25
      %28 = dma.hbm_to_vmem [thread:$0]  %s0, 128, %s26, [#allocation4]
    $region5: #{tpu_custom_call.1} parent=1 // pred_fallthru
      _
    // Predicated region
    $region6: #{tpu_custom_call.1} parent=1 // pred_check
      _
    $region7: #{tpu_custom_call.1} parent=1 // pred_check_branch
      %30 = sbr.rel (0) target = $region9
    $region8: #{tpu_custom_call.1} parent=1 // pred_region
      %s32 = ssub.s32 128, 128
      %33 = vsyncadd [#allocation6], %s32
      %s35 = sshll.u32 [#allocation5], 4
      %s36 = int_to_ptr.vmem [resolvable:$true] %s35
      %38 = dma.hbm_to_vmem [thread:$0]  %s1, 128, %s36, [#allocation6]
    $region9: #{tpu_custom_call.1} parent=1 // pred_fallthru
      _
    // Predicated region
    $region10: #{tpu_custom_call.1} parent=1 // pred_check
      _
    $region11: #{tpu_custom_call.1} parent=1 // pred_check_branch
      %40 = sbr.rel (0) target = $region13
    $region12: #{tpu_custom_call.1} parent=1 // pred_region
      _
    $region13: #{tpu_custom_call.1} parent=1 // pred_fallthru
      _
    // Predicated region
    $region14: #{tpu_custom_call.1} parent=1 // pred_check
      _
    $region15: #{tpu_custom_call.1} parent=1 // pred_check_branch
      %42 = sbr.rel (0) target = $region17
    $region16: #{tpu_custom_call.1} parent=1 // pred_region
      %s44 = ssub.s32 2048, 2048
      %45 = vsyncadd [#allocation6], %s44
      %s46 = sshll.u32 [#allocation7], 4
      %s47 = int_to_ptr.vmem [resolvable:$true] %s46
      %52 = dma.hbm_to_vmem [thread:$0]  %s3, 2048, %s47, [#allocation6], 64, 64, 4
    $region17: #{tpu_custom_call.1} parent=1 // pred_fallthru
      _
    // Predicated region
    $region18: #{tpu_custom_call.1} parent=1 // pred_check
      _
    $region19: #{tpu_custom_call.1} parent=1 // pred_check_branch
      %54 = sbr.rel (0) target = $region21
    $region20: #{tpu_custom_call.1} parent=1 // pred_region
      _
    $region21: #{tpu_custom_call.1} parent=1 // pred_fallthru
      _
    // Predicated region
    $region22: #{tpu_custom_call.1} parent=1 // pred_check
      _
    $region23: #{tpu_custom_call.1} parent=1 // pred_check_branch
      %56 = sbr.rel (0) target = $region25
    $region24: #{tpu_custom_call.1} parent=1 // pred_region
      %s58 = ssub.s32 2048, 2048
      %59 = vsyncadd [#allocation9], %s58
      %s60 = sshll.u32 [#allocation8], 4
      %s61 = int_to_ptr.vmem [resolvable:$true] %s60
      %66 = dma.hbm_to_vmem [thread:$0]  %s5, 2048, %s61, [#allocation9], 64, 64, 4
    $region25: #{tpu_custom_call.1} parent=1 // pred_fallthru
      _
    // Predicated region
    $region26: #{tpu_custom_call.1} parent=1 // pred_check
      _
    $region27: #{tpu_custom_call.1} parent=1 // pred_check_branch
      %68 = sbr.rel (0) target = $region29
    $region28: #{tpu_custom_call.1} parent=1 // pred_region
      _
    $region29: #{tpu_custom_call.1} parent=1 // pred_fallthru
      _
    // Predicated region
    $region30: #{tpu_custom_call.1} parent=1 // pred_check
      _
    $region31: #{tpu_custom_call.1} parent=1 // pred_check_branch
      %70 = sbr.rel (0) target = $region33
    $region32: #{tpu_custom_call.1} parent=1 // pred_region
      _
    $region33: #{tpu_custom_call.1} parent=1 // pred_fallthru
      _
    // Predicated region
    $region34: #{tpu_custom_call.1} parent=1 // pred_check
      _
    $region35: #{tpu_custom_call.1} parent=1 // pred_check_branch
      %72 = sbr.rel (0) target = $region37
    $region36: #{tpu_custom_call.1} parent=1 // pred_region
      _
    $region37: #{tpu_custom_call.1} parent=1 // pred_fallthru
      _
    // Predicated region
    $region38: #{tpu_custom_call.1} parent=1 // pred_check
      _
    $region39: #{tpu_custom_call.1} parent=1 // pred_check_branch
      %74 = sbr.rel (0) target = $region41
    $region40: #{tpu_custom_call.1} parent=1 // pred_region
      %75 = dma.done [#allocation4], 128
    $region41: #{tpu_custom_call.1} parent=1 // pred_fallthru
      _
    // Predicated region
    $region42: #{tpu_custom_call.1} parent=1 // pred_check
      _
    $region43: #{tpu_custom_call.1} parent=1 // pred_check_branch
      %77 = sbr.rel (0) target = $region45
    $region44: #{tpu_custom_call.1} parent=1 // pred_region
      %78 = dma.done [#allocation6], 128
    $region45: #{tpu_custom_call.1} parent=1 // pred_fallthru
      _
    // Predicated region
    $region46: #{tpu_custom_call.1} parent=1 // pred_check
      _
    $region47: #{tpu_custom_call.1} parent=1 // pred_check_branch
      %80 = sbr.rel (0) target = $region49
    $region48: #{tpu_custom_call.1} parent=1 // pred_region
      %81 = dma.done [#allocation6], 2048
    $region49: #{tpu_custom_call.1} parent=1 // pred_fallthru
      _
    // Predicated region
    $region50: #{tpu_custom_call.1} parent=1 // pred_check
      _
    $region51: #{tpu_custom_call.1} parent=1 // pred_check_branch
      %83 = sbr.rel (0) target = $region53
    $region52: #{tpu_custom_call.1} parent=1 // pred_region
      %84 = dma.done [#allocation9], 2048
    $region53: #{tpu_custom_call.1} parent=1 // pred_fallthru
      _
    %v86 = vld [vmem:[#allocation3] sm:$0xff]
    %v87 = vld [vmem:[#allocation5] sm:$0xff]
    %v88 = vld [vmem:[%s2] sm:$0x3]
    %v89 = vld [vmem:[%s4] sm:$0x1]
    %v90 = vlaneseq
    %v91 = vshrl.u32 %v90, 7
    %v92 = vsub.s32 0, %v91
    %v93 = vrot.slane %v87, %v92
    %v94 = vmul.f32 %v86, %v93
    %v95 = vlaneseq
    %v96 = vshrl.u32 %v95, 7
    %v97 = vsub.s32 0, %v96
    %v98 = vrot.slane %v88, %v97
    %v99 = vadd.f32 %v98, %v94
    %v100 = vlaneseq
    %v101 = vshrl.u32 %v100, 7
    %v102 = vsub.s32 1, %v101
    %v103 = vrot.slane %v87, %v102
    %v105 = vrot.slane %v86, 2
    %v107 = vmul.f32 %v105, %v103
    %v108 = vadd.f32 %v99, %v107
    %v109 = vlaneseq
    %v110 = vshrl.u32 %v109, 7
    %v111 = vsub.s32 2, %v110
    %v112 = vrot.slane %v87, %v111
    %v113 = vrot.slane %v86, 4
    %v115 = vmul.f32 %v113, %v112
    %v116 = vadd.f32 %v108, %v115
    %v117 = vlaneseq
    %v118 = vshrl.u32 %v117, 7
    %v119 = vsub.s32 3, %v118
    %v120 = vrot.slane %v87, %v119
    %v121 = vrot.slane %v86, 6
    %v123 = vmul.f32 %v121, %v120
    %v124 = vadd.f32 %v116, %v123
    %v125 = vmul.f32 %v124, 0.2
    %v126 = vmax.f32 %v124, %v125
    %v127 = vpack.c.bf16 %v126, %v126
    %v128 = vld [vmem:[#allocation7] sm:$0xf]
    %v129 = vld [vmem:[#allocation7 + $0x4] sm:$0xf]
    %v130 = vld [vmem:[#allocation7 + $0x8] sm:$0xf]
    %v131 = vld [vmem:[#allocation7 + $0xc] sm:$0xf]
    %v132 = vld [vmem:[#allocation7 + $0x10] sm:$0xf]
    %v133 = vld [vmem:[#allocation7 + $0x14] sm:$0xf]
    %v134 = vld [vmem:[#allocation7 + $0x18] sm:$0xf]
    %v135 = vld [vmem:[#allocation7 + $0x1c] sm:$0xf]
    %v136 = vld [vmem:[#allocation7 + $0x20] sm:$0xf]
    %v137 = vld [vmem:[#allocation7 + $0x24] sm:$0xf]
    %v138 = vld [vmem:[#allocation7 + $0x28] sm:$0xf]
    %v139 = vld [vmem:[#allocation7 + $0x2c] sm:$0xf]
    %v140 = vld [vmem:[#allocation7 + $0x30] sm:$0xf]
    %v141 = vld [vmem:[#allocation7 + $0x34] sm:$0xf]
    %v142 = vld [vmem:[#allocation7 + $0x38] sm:$0xf]
    %v143 = vld [vmem:[#allocation7 + $0x3c] sm:$0xf]
    %v160 = vunpack.c.l.b16 %v128
    %v161 = vunpack.c.l.b16 %v129
    %v162 = vunpack.c.l.b16 %v130
    %v163 = vunpack.c.l.b16 %v131
    %v164 = vunpack.c.l.b16 %v132
    %v165 = vunpack.c.l.b16 %v133
    %v166 = vunpack.c.l.b16 %v134
    %v167 = vunpack.c.l.b16 %v135
    %v168 = vunpack.c.l.b16 %v136
    %v169 = vunpack.c.l.b16 %v137
    %v170 = vunpack.c.l.b16 %v138
    %v171 = vunpack.c.l.b16 %v139
    %v172 = vunpack.c.l.b16 %v140
    %v173 = vunpack.c.l.b16 %v141
    %v174 = vunpack.c.l.b16 %v142
    %v175 = vunpack.c.l.b16 %v143
    %v176 = vpack.c.b16 %v161, %v160
    %v177 = vpack.c.b16 %v163, %v162
    %v178 = vpack.c.b16 %v165, %v164
    %v179 = vpack.c.b16 %v167, %v166
    %v180 = vpack.c.b16 %v169, %v168
    %v181 = vpack.c.b16 %v171, %v170
    %v182 = vpack.c.b16 %v173, %v172
    %v183 = vpack.c.b16 %v175, %v174
    %192 = vmatprep.subr.bf16.mxu0 0
    %193 = vmatpush1.bf16.msra.mxu0 %v176
    %194 = vmatprep.subr.bf16.mxu0 0
    %195 = vmatpush1.bf16.msra.mxu0 %v177
    %196 = vmatprep.subr.bf16.mxu0 0
    %197 = vmatpush1.bf16.msra.mxu0 %v178
    %198 = vmatprep.subr.bf16.mxu0 0
    %199 = vmatpush1.bf16.msra.mxu0 %v179
    %200 = vmatprep.subr.bf16.mxu0 0
    %201 = vmatpush1.bf16.msra.mxu0 %v180
    %202 = vmatprep.subr.bf16.mxu0 0
    %203 = vmatpush1.bf16.msra.mxu0 %v181
    %204 = vmatprep.subr.bf16.mxu0 0
    %205 = vmatpush1.bf16.msra.mxu0 %v182
    %206 = vmatprep.subr.bf16.mxu0 0
    %207 = vmatpush1.bf16.msra.mxu0 %v183
    %208 = vmatprep.subr.bf16.mxu0 0
    %209 = vmatpush1.bf16.msra.mxu0 0
    %210 = vmatprep.subr.bf16.mxu0 0
    %211 = vmatpush1.bf16.msra.mxu0 0
    %212 = vmatprep.subr.bf16.mxu0 0
    %213 = vmatpush1.bf16.msra.mxu0 0
    %214 = vmatprep.subr.bf16.mxu0 0
    %215 = vmatpush1.bf16.msra.mxu0 0
    %216 = vmatprep.subr.bf16.mxu0 0
    %217 = vmatpush1.bf16.msra.mxu0 0
    %218 = vmatprep.subr.bf16.mxu0 0
    %219 = vmatpush1.bf16.msra.mxu0 0
    %220 = vmatprep.subr.bf16.mxu0 0
    %221 = vmatpush1.bf16.msra.mxu0 0
    %222 = vmatprep.subr.bf16.mxu0 0
    %223 = vmatpush1.bf16.msra.mxu0 0
    %224 = vmatprep.mubr.bf16.mxu0 0
    %225 = vmatmul.mubr.bf16.gmra.mrb[0].mxu0 %v127
    %v226 = vpop.f32.mrb[0].mxu0
    %v227 = vadd.f32 0.0, %v226
    %v228 = vpop.f32.mrb[0].mxu0
    %v229 = vpop.f32.mrb[0].mxu0
    %v230 = vpop.f32.mrb[0].mxu0
    %231 = vdwg.mxu0
    %v233 = vlaneseq
    %v234 = vshrl.u32 %v233, 7
    %v235 = vsub.s32 0, %v234
    %v236 = vrot.slane %v89, %v235
    %v238 = vadd.f32 %v236, %v227
    %v239 = vlaneseq
    %v240 = vshrl.u32 %v239, 7
    %v241 = vsub.s32 4, %v240
    %v242 = vrot.slane %v87, %v241
    %v243 = vmul.f32 %v86, %v242
    %v244 = vlaneseq
    %v245 = vshrl.u32 %v244, 7
    %v246 = vsub.s32 1, %v245
    %v247 = vrot.slane %v88, %v246
    %v248 = vadd.f32 %v247, %v243
    %v249 = vlaneseq
    %v250 = vshrl.u32 %v249, 7
    %v251 = vsub.s32 5, %v250
    %v252 = vrot.slane %v87, %v251
    %v253 = vmul.f32 %v105, %v252
    %v254 = vadd.f32 %v248, %v253
    %v255 = vlaneseq
    %v256 = vshrl.u32 %v255, 7
    %v257 = vsub.s32 6, %v256
    %v258 = vrot.slane %v87, %v257
    %v259 = vmul.f32 %v113, %v258
    %v260 = vadd.f32 %v254, %v259
    %v261 = vlaneseq
    %v262 = vshrl.u32 %v261, 7
    %v263 = vsub.s32 7, %v262
    %v264 = vrot.slane %v87, %v263
    %v265 = vmul.f32 %v121, %v264
    %v266 = vadd.f32 %v260, %v265
    %v267 = vmul.f32 %v266, 0.2
    %v268 = vmax.f32 %v266, %v267
    %v269 = vpack.c.bf16 %v268, %v268
    %s270 = scalar_lea.vmem [#allocation7], 64
    %v271 = vld [vmem:[%s270] sm:$0xf]
    %v272 = vld [vmem:[%s270 + $0x4] sm:$0xf]
    %v273 = vld [vmem:[%s270 + $0x8] sm:$0xf]
    %v274 = vld [vmem:[%s270 + $0xc] sm:$0xf]
    %v275 = vld [vmem:[%s270 + $0x10] sm:$0xf]
    %v276 = vld [vmem:[%s270 + $0x14] sm:$0xf]
    %v277 = vld [vmem:[%s270 + $0x18] sm:$0xf]
    %v278 = vld [vmem:[%s270 + $0x1c] sm:$0xf]
    %v279 = vld [vmem:[%s270 + $0x20] sm:$0xf]
    %v280 = vld [vmem:[%s270 + $0x24] sm:$0xf]
    %v281 = vld [vmem:[%s270 + $0x28] sm:$0xf]
    %v282 = vld [vmem:[%s270 + $0x2c] sm:$0xf]
    %v283 = vld [vmem:[%s270 + $0x30] sm:$0xf]
    %v284 = vld [vmem:[%s270 + $0x34] sm:$0xf]
    %v285 = vld [vmem:[%s270 + $0x38] sm:$0xf]
    %v286 = vld [vmem:[%s270 + $0x3c] sm:$0xf]
    %v303 = vunpack.c.l.b16 %v271
    %v304 = vunpack.c.l.b16 %v272
    %v305 = vunpack.c.l.b16 %v273
    %v306 = vunpack.c.l.b16 %v274
    %v307 = vunpack.c.l.b16 %v275
    %v308 = vunpack.c.l.b16 %v276
    %v309 = vunpack.c.l.b16 %v277
    %v310 = vunpack.c.l.b16 %v278
    %v311 = vunpack.c.l.b16 %v279
    %v312 = vunpack.c.l.b16 %v280
    %v313 = vunpack.c.l.b16 %v281
    %v314 = vunpack.c.l.b16 %v282
    %v315 = vunpack.c.l.b16 %v283
    %v316 = vunpack.c.l.b16 %v284
    %v317 = vunpack.c.l.b16 %v285
    %v318 = vunpack.c.l.b16 %v286
    %v319 = vpack.c.b16 %v304, %v303
    %v320 = vpack.c.b16 %v306, %v305
    %v321 = vpack.c.b16 %v308, %v307
    %v322 = vpack.c.b16 %v310, %v309
    %v323 = vpack.c.b16 %v312, %v311
    %v324 = vpack.c.b16 %v314, %v313
    %v325 = vpack.c.b16 %v316, %v315
    %v326 = vpack.c.b16 %v318, %v317
    %335 = vmatprep.subr.bf16.mxu0 0
    %336 = vmatpush1.bf16.msra.mxu0 %v319
    %337 = vmatprep.subr.bf16.mxu0 0
    %338 = vmatpush1.bf16.msra.mxu0 %v320
    %339 = vmatprep.subr.bf16.mxu0 0
    %340 = vmatpush1.bf16.msra.mxu0 %v321
    %341 = vmatprep.subr.bf16.mxu0 0
    %342 = vmatpush1.bf16.msra.mxu0 %v322
    %343 = vmatprep.subr.bf16.mxu0 0
    %344 = vmatpush1.bf16.msra.mxu0 %v323
    %345 = vmatprep.subr.bf16.mxu0 0
    %346 = vmatpush1.bf16.msra.mxu0 %v324
    %347 = vmatprep.subr.bf16.mxu0 0
    %348 = vmatpush1.bf16.msra.mxu0 %v325
    %349 = vmatprep.subr.bf16.mxu0 0
    %350 = vmatpush1.bf16.msra.mxu0 %v326
    %351 = vmatprep.subr.bf16.mxu0 0
    %352 = vmatpush1.bf16.msra.mxu0 0
    %353 = vmatprep.subr.bf16.mxu0 0
    %354 = vmatpush1.bf16.msra.mxu0 0
    %355 = vmatprep.subr.bf16.mxu0 0
    %356 = vmatpush1.bf16.msra.mxu0 0
    %357 = vmatprep.subr.bf16.mxu0 0
    %358 = vmatpush1.bf16.msra.mxu0 0
    %359 = vmatprep.subr.bf16.mxu0 0
    %360 = vmatpush1.bf16.msra.mxu0 0
    %361 = vmatprep.subr.bf16.mxu0 0
    %362 = vmatpush1.bf16.msra.mxu0 0
    %363 = vmatprep.subr.bf16.mxu0 0
    %364 = vmatpush1.bf16.msra.mxu0 0
    %365 = vmatprep.subr.bf16.mxu0 0
    %366 = vmatpush1.bf16.msra.mxu0 0
    %367 = vmatprep.mubr.bf16.mxu0 0
    %368 = vmatmul.mubr.bf16.gmra.mrb[0].mxu0 %v269
    %v369 = vpop.f32.mrb[0].mxu0
    %v370 = vadd.f32 0.0, %v369
    %v371 = vpop.f32.mrb[0].mxu0
    %v372 = vpop.f32.mrb[0].mxu0
    %v373 = vpop.f32.mrb[0].mxu0
    %374 = vdwg.mxu0
    %v375 = vadd.f32 %v238, %v370
    %v376 = vmul.f32 %v375, 0.2
    %v377 = vmax.f32 %v375, %v376
    %v378 = vpack.c.bf16 %v377, %v377
    %v379 = vld [vmem:[#allocation8] sm:$0xf]
    %v380 = vld [vmem:[#allocation8 + $0x4] sm:$0xf]
    %v381 = vld [vmem:[#allocation8 + $0x8] sm:$0xf]
    %v382 = vld [vmem:[#allocation8 + $0xc] sm:$0xf]
    %v383 = vld [vmem:[#allocation8 + $0x10] sm:$0xf]
    %v384 = vld [vmem:[#allocation8 + $0x14] sm:$0xf]
    %v385 = vld [vmem:[#allocation8 + $0x18] sm:$0xf]
    %v386 = vld [vmem:[#allocation8 + $0x1c] sm:$0xf]
    %v387 = vld [vmem:[#allocation8 + $0x20] sm:$0xf]
    %v388 = vld [vmem:[#allocation8 + $0x24] sm:$0xf]
    %v389 = vld [vmem:[#allocation8 + $0x28] sm:$0xf]
    %v390 = vld [vmem:[#allocation8 + $0x2c] sm:$0xf]
    %v391 = vld [vmem:[#allocation8 + $0x30] sm:$0xf]
    %v392 = vld [vmem:[#allocation8 + $0x34] sm:$0xf]
    %v393 = vld [vmem:[#allocation8 + $0x38] sm:$0xf]
    %v394 = vld [vmem:[#allocation8 + $0x3c] sm:$0xf]
    %v395 = vld [vmem:[%s6] sm:$0x1]
    %v397 = vlaneseq
    %v398 = vshrl.u32 %v397, 7
    %v399 = vsub.s32 0, %v398
    %v400 = vrot.slane %v395, %v399
    %v418 = vunpack.c.l.b16 %v379
    %v419 = vunpack.c.l.b16 %v380
    %v420 = vunpack.c.l.b16 %v381
    %v421 = vunpack.c.l.b16 %v382
    %v422 = vunpack.c.l.b16 %v383
    %v423 = vunpack.c.l.b16 %v384
    %v424 = vunpack.c.l.b16 %v385
    %v425 = vunpack.c.l.b16 %v386
    %v426 = vunpack.c.l.b16 %v387
    %v427 = vunpack.c.l.b16 %v388
    %v428 = vunpack.c.l.b16 %v389
    %v429 = vunpack.c.l.b16 %v390
    %v430 = vunpack.c.l.b16 %v391
    %v431 = vunpack.c.l.b16 %v392
    %v432 = vunpack.c.l.b16 %v393
    %v433 = vunpack.c.l.b16 %v394
    %v434 = vpack.c.b16 %v419, %v418
    %v435 = vpack.c.b16 %v421, %v420
    %v436 = vpack.c.b16 %v423, %v422
    %v437 = vpack.c.b16 %v425, %v424
    %v438 = vpack.c.b16 %v427, %v426
    %v439 = vpack.c.b16 %v429, %v428
    %v440 = vpack.c.b16 %v431, %v430
    %v441 = vpack.c.b16 %v433, %v432
    %450 = vmatprep.subr.bf16.mxu0 0
    %451 = vmatpush1.bf16.msra.mxu0 %v434
    %452 = vmatprep.subr.bf16.mxu0 0
    %453 = vmatpush1.bf16.msra.mxu0 %v435
    %454 = vmatprep.subr.bf16.mxu0 0
    %455 = vmatpush1.bf16.msra.mxu0 %v436
    %456 = vmatprep.subr.bf16.mxu0 0
    %457 = vmatpush1.bf16.msra.mxu0 %v437
    %458 = vmatprep.subr.bf16.mxu0 0
    %459 = vmatpush1.bf16.msra.mxu0 %v438
    %460 = vmatprep.subr.bf16.mxu0 0
    %461 = vmatpush1.bf16.msra.mxu0 %v439
    %462 = vmatprep.subr.bf16.mxu0 0
    %463 = vmatpush1.bf16.msra.mxu0 %v440
    %464 = vmatprep.subr.bf16.mxu0 0
    %465 = vmatpush1.bf16.msra.mxu0 %v441
    %466 = vmatprep.subr.bf16.mxu0 0
    %467 = vmatpush1.bf16.msra.mxu0 0
    %468 = vmatprep.subr.bf16.mxu0 0
    %469 = vmatpush1.bf16.msra.mxu0 0
    %470 = vmatprep.subr.bf16.mxu0 0
    %471 = vmatpush1.bf16.msra.mxu0 0
    %472 = vmatprep.subr.bf16.mxu0 0
    %473 = vmatpush1.bf16.msra.mxu0 0
    %474 = vmatprep.subr.bf16.mxu0 0
    %475 = vmatpush1.bf16.msra.mxu0 0
    %476 = vmatprep.subr.bf16.mxu0 0
    %477 = vmatpush1.bf16.msra.mxu0 0
    %478 = vmatprep.subr.bf16.mxu0 0
    %479 = vmatpush1.bf16.msra.mxu0 0
    %480 = vmatprep.subr.bf16.mxu0 0
    %481 = vmatpush1.bf16.msra.mxu0 0
    %482 = vmatprep.mubr.bf16.mxu0 0
    %483 = vmatmul.mubr.bf16.gmra.mrb[0].mxu0 %v378
    %v484 = vpop.f32.mrb[0].mxu0
    %v485 = vadd.f32 %v400, %v484
    %v486 = vpop.f32.mrb[0].mxu0
    %v487 = vpop.f32.mrb[0].mxu0
    %v488 = vpop.f32.mrb[0].mxu0
    %489 = vdwg.mxu0
    %v490 = vmul.f32 %v485, 0.2
    %v491 = vmax.f32 %v485, %v490
    %v492 = vpack.c.bf16 %v491, %v491
    %s493 = scalar_lea.vmem [#allocation8], 64
    %v494 = vld [vmem:[%s493] sm:$0xf]
    %v495 = vld [vmem:[%s493 + $0x4] sm:$0xf]
    %v496 = vld [vmem:[%s493 + $0x8] sm:$0xf]
    %v497 = vld [vmem:[%s493 + $0xc] sm:$0xf]
    %v498 = vld [vmem:[%s493 + $0x10] sm:$0xf]
    %v499 = vld [vmem:[%s493 + $0x14] sm:$0xf]
    %v500 = vld [vmem:[%s493 + $0x18] sm:$0xf]
    %v501 = vld [vmem:[%s493 + $0x1c] sm:$0xf]
    %v502 = vld [vmem:[%s493 + $0x20] sm:$0xf]
    %v503 = vld [vmem:[%s493 + $0x24] sm:$0xf]
    %v504 = vld [vmem:[%s493 + $0x28] sm:$0xf]
    %v505 = vld [vmem:[%s493 + $0x2c] sm:$0xf]
    %v506 = vld [vmem:[%s493 + $0x30] sm:$0xf]
    %v507 = vld [vmem:[%s493 + $0x34] sm:$0xf]
    %v508 = vld [vmem:[%s493 + $0x38] sm:$0xf]
    %v509 = vld [vmem:[%s493 + $0x3c] sm:$0xf]
    %s510 = scalar_lea.vmem %s6, 1
    %v511 = vld [vmem:[%s510] sm:$0x1]
    %v513 = vlaneseq
    %v514 = vshrl.u32 %v513, 7
    %v515 = vsub.s32 0, %v514
    %v516 = vrot.slane %v511, %v515
    %v534 = vunpack.c.l.b16 %v494
    %v535 = vunpack.c.l.b16 %v495
    %v536 = vunpack.c.l.b16 %v496
    %v537 = vunpack.c.l.b16 %v497
    %v538 = vunpack.c.l.b16 %v498
    %v539 = vunpack.c.l.b16 %v499
    %v540 = vunpack.c.l.b16 %v500
    %v541 = vunpack.c.l.b16 %v501
    %v542 = vunpack.c.l.b16 %v502
    %v543 = vunpack.c.l.b16 %v503
    %v544 = vunpack.c.l.b16 %v504
    %v545 = vunpack.c.l.b16 %v505
    %v546 = vunpack.c.l.b16 %v506
    %v547 = vunpack.c.l.b16 %v507
    %v548 = vunpack.c.l.b16 %v508
    %v549 = vunpack.c.l.b16 %v509
    %v550 = vpack.c.b16 %v535, %v534
    %v551 = vpack.c.b16 %v537, %v536
    %v552 = vpack.c.b16 %v539, %v538
    %v553 = vpack.c.b16 %v541, %v540
    %v554 = vpack.c.b16 %v543, %v542
    %v555 = vpack.c.b16 %v545, %v544
    %v556 = vpack.c.b16 %v547, %v546
    %v557 = vpack.c.b16 %v549, %v548
    %566 = vmatprep.subr.bf16.mxu0 0
    %567 = vmatpush1.bf16.msra.mxu0 %v550
    %568 = vmatprep.subr.bf16.mxu0 0
    %569 = vmatpush1.bf16.msra.mxu0 %v551
    %570 = vmatprep.subr.bf16.mxu0 0
    %571 = vmatpush1.bf16.msra.mxu0 %v552
    %572 = vmatprep.subr.bf16.mxu0 0
    %573 = vmatpush1.bf16.msra.mxu0 %v553
    %574 = vmatprep.subr.bf16.mxu0 0
    %575 = vmatpush1.bf16.msra.mxu0 %v554
    %576 = vmatprep.subr.bf16.mxu0 0
    %577 = vmatpush1.bf16.msra.mxu0 %v555
    %578 = vmatprep.subr.bf16.mxu0 0
    %579 = vmatpush1.bf16.msra.mxu0 %v556
    %580 = vmatprep.subr.bf16.mxu0 0
    %581 = vmatpush1.bf16.msra.mxu0 %v557
    %582 = vmatprep.subr.bf16.mxu0 0
    %583 = vmatpush1.bf16.msra.mxu0 0
    %584 = vmatprep.subr.bf16.mxu0 0
    %585 = vmatpush1.bf16.msra.mxu0 0
    %586 = vmatprep.subr.bf16.mxu0 0
    %587 = vmatpush1.bf16.msra.mxu0 0
    %588 = vmatprep.subr.bf16.mxu0 0
    %589 = vmatpush1.bf16.msra.mxu0 0
    %590 = vmatprep.subr.bf16.mxu0 0
    %591 = vmatpush1.bf16.msra.mxu0 0
    %592 = vmatprep.subr.bf16.mxu0 0
    %593 = vmatpush1.bf16.msra.mxu0 0
    %594 = vmatprep.subr.bf16.mxu0 0
    %595 = vmatpush1.bf16.msra.mxu0 0
    %596 = vmatprep.subr.bf16.mxu0 0
    %597 = vmatpush1.bf16.msra.mxu0 0
    %598 = vmatprep.mubr.bf16.mxu0 0
    %599 = vmatmul.mubr.bf16.gmra.mrb[0].mxu0 %v492
    %v600 = vpop.f32.mrb[0].mxu0
    %v601 = vadd.f32 %v516, %v600
    %v602 = vpop.f32.mrb[0].mxu0
    %v603 = vpop.f32.mrb[0].mxu0
    %v604 = vpop.f32.mrb[0].mxu0
    %605 = vdwg.mxu0
    %v606 = vmul.f32 %v601, 0.2
    %v607 = vmax.f32 %v601, %v606
    %v608 = vld [vmem:[%s7] sm:$0x1]
    %v610 = vlaneseq
    %v611 = vshrl.u32 %v610, 7
    %v612 = vsub.s32 0, %v611
    %v613 = vrot.slane %v608, %v612
    %v615 = vmul.f32 %v607, %v613
    %vm616 = vcmask 1041408
    %v617 = vsel %vm616, %v615, 0.0
    %618 = vadd.xlane.f32.xlu0 %v617
    %v619 = vpop.xlane.xlu0 %618
    %v620 = vld [vmem:[#allocation2] sm:$0x1]
    %v622 = vlaneseq
    %v623 = vshrl.u32 %v622, 7
    %v624 = vsub.s32 0, %v623
    %v625 = vrot.slane %v620, %v624
    %v627 = vadd.f32 %v619, %v625
    %vm628 = vcmask 1024
    %629 = vst.msk [vmem:[%s9] sm:$0x3] %vm628, %v627
    // Predicated region
    $region54: #{tpu_custom_call.1} parent=1 // pred_check
      _
    $region55: #{tpu_custom_call.1} parent=1 // pred_check_branch
      %631 = sbr.rel (0) target = $region57
    $region56: #{tpu_custom_call.1} parent=1 // pred_region
      _
    $region57: #{tpu_custom_call.1} parent=1 // pred_fallthru
      _
    // Predicated region
    $region58: #{tpu_custom_call.1} parent=1 // pred_check
      _
    $region59: #{tpu_custom_call.1} parent=1 // pred_check_branch
      %633 = sbr.rel (0) target = $region61
    $region60: #{tpu_custom_call.1} parent=1 // pred_region
      _
    $region61: #{tpu_custom_call.1} parent=1 // pred_fallthru
      _
    %634 = vsyncpa [#allocation4], 1
    %635 = vsyncpa [#allocation6], 1
    %636 = vsyncpa [#allocation9], 1

</llo_original>
